<compile_context>
chip_gen: v6e
topology: v6e:2x2x1
jax: 0.10.0
libtpu: 0.0.40
codegen_flags: <defaults>
</compile_context>

<pallas_src>
import functools

import jax
import jax.numpy as jnp
from jax.experimental import pallas as pl
from jax.experimental.pallas import tpu as pltpu


def _fae_kernel(hg_ref, hv_ref, wdg_ref, wdv_ref, bd_ref, o_ref):
    # hg_ref : (TB, Dg)   graph embeddings, features on the lane axis
    # hv_ref : (TB, Dv)   node  embeddings, features on the lane axis
    # wdg_ref: (1, Dg)    w[1]-w[0] restricted to the graph features
    # wdv_ref: (1, Dv)    w[1]-w[0] restricted to the node  features
    # bd_ref : (1, 1)     b[1]-b[0]
    # o_ref  : (2, TB)    per-class probabilities, batch on the lane axis
    #
    # d[n] = (w1-w0)·x_n + (b1-b0)  ==  logit1 - logit0   -> (1, TB) lane-dense.
    # TODO(synk): if the producer can supply h_G/h_v feature-major (dim, B),
    # the RHS-transposed contraction (possible per-step XLU transpose) goes away.
    d = jax.lax.dot_general(
        wdg_ref[...], hg_ref[...], (((1,), (1,)), ((), ())),
        preferred_element_type=jnp.float32)
    d = d + jax.lax.dot_general(
        wdv_ref[...], hv_ref[...], (((1,), (1,)), ((), ())),
        preferred_element_type=jnp.float32)
    d = d + bd_ref[...]
    # Closed-form 2-class softmax: p0 = 1/(1+exp(y1-y0)); safe at extremes.
    p0 = 1.0 / (1.0 + jnp.exp(d))                       # exact divide, 1e-5 ok
    o_ref[...] = jnp.concatenate([p0, 1.0 - p0], axis=0).astype(o_ref.dtype)


@functools.partial(jax.jit, static_argnames=("tb",))
def f_add_edge_forward_batched(h_G, h_v, weight, bias, *, tb=2048):
    """Batched forward.

    h_G: (B, graph_dim), h_v: (B, node_dim), weight: (2, D), bias: (2,).
    Returns a lane-dense (2, B) slab: row 0 = P(class 0), row 1 = P(class 1).
    (Transpose in the consumer if a (B, 2) layout is really needed.)
    """
    h_G = jnp.asarray(h_G, jnp.float32)
    h_v = jnp.asarray(h_v, jnp.float32)
    w = jnp.asarray(weight, jnp.float32)
    b = jnp.asarray(bias, jnp.float32)

    B, Dg = h_G.shape
    _, Dv = h_v.shape

    # Collapse the 2-class linear into one difference row; split feature-wise
    # so no (B, D) concat buffer ever materializes in HBM.
    wd = (w[1] - w[0]).reshape(1, Dg + Dv)
    wdg = wd[:, :Dg]
    wdv = wd[:, Dg:]
    bd = (b[1] - b[0]).reshape(1, 1)

    # ---- batch-tile selection (shapes are static under jit) ----
    if B <= 256:
        # Tiny batch: one full-extent tile (full-dim blocks always satisfy the
        # (8,128) rule). Launch latency dominates here anyway.
        TB = B
    else:
        # Keep >= 2 tiles so the "parallel" grid axis can shard across v7x's
        # two TensorCores, but make tiles big (multiple of 128 lanes) so the
        # per-step DMA swamps the ~0.35 us pipeline overhead.
        TB = min(tb, ((pl.cdiv(B, 2) + 127) // 128) * 128)
        TB = max(TB, 128)
    grid = pl.cdiv(B, TB)        # partial last block: output writes are masked

    out = pl.pallas_call(
        _fae_kernel,
        out_shape=jax.ShapeDtypeStruct((2, B), jnp.float32),
        grid_spec=pltpu.PrefetchScalarGridSpec(
            num_scalar_prefetch=0,
            grid=(grid,),
            in_specs=[
                pl.BlockSpec((TB, Dg), lambda i: (i, 0)),   # h_G tile
                pl.BlockSpec((TB, Dv), lambda i: (i, 0)),   # h_v tile
                pl.BlockSpec((1, Dg), lambda i: (0, 0)),    # wd_G (resident)
                pl.BlockSpec((1, Dv), lambda i: (0, 0)),    # wd_v (resident)
                pl.BlockSpec((1, 1), lambda i: (0, 0)),     # bd   (resident)
            ],
            out_specs=pl.BlockSpec((2, TB), lambda i: (0, i)),
        ),
        compiler_params=pltpu.CompilerParams(
            dimension_semantics=("parallel",)),   # v7x: tiles over both TCs
    )(h_G, h_v, wdg, wdv, bd)

    return out                                     # (2, B)


@jax.jit
def f_add_edge_forward(h_G, h_v, weight, bias):
    """Single-edge forward matching the PyTorch module exactly: returns (2,).

    A lone (64 -> 2) linear + 2-way softmax is ~100% launch latency as a
    standalone Pallas custom call, so (per perf review) it is a fused XLA
    expression here; use f_add_edge_forward_batched for real workloads.
    """
    x = jnp.concatenate([jnp.ravel(h_G), jnp.ravel(h_v)], axis=0)
    return jax.nn.softmax(jnp.asarray(weight, jnp.float32) @ x
                          + jnp.asarray(bias, jnp.float32), axis=0)


if __name__ == "__main__":
    node_embedding_dim = 32
    graph_dim = 32
    D = graph_dim + node_embedding_dim

    key = jax.random.PRNGKey(0)
    k1, k2, k3, k4, k5, k6 = jax.random.split(key, 6)

    # Deterministic "Linear(D, 2)" parameters (uniform init like PyTorch).
    bound = 1.0 / (D ** 0.5)
    weight = jax.random.uniform(k1, (2, D), jnp.float32, -bound, bound)
    bias = jax.random.uniform(k2, (2,), jnp.float32, -bound, bound)

    # Single-edge inputs (module semantics).
    h_G = jax.random.normal(k3, (graph_dim,), jnp.float32)
    h_v = jax.random.normal(k4, (node_embedding_dim,), jnp.float32)

    # Small batch: single full-extent tile path (B = 200, not 8/128 aligned).
    B1 = 200
    hG_b = jax.random.normal(k5, (B1, graph_dim), jnp.float32)
    hv_b = jax.random.normal(k6, (B1, node_embedding_dim), jnp.float32)
    out_b = jax.block_until_ready(
        f_add_edge_forward_batched(hG_b, hv_b, weight, bias))
    xb = jnp.concatenate([hG_b, hv_b], axis=1)
    ref_b = jax.nn.softmax(xb @ weight.T + bias, axis=-1)        # (B, 2)
    assert out_b.shape == (2, B1)
    assert jnp.allclose(out_b, ref_b.T, atol=1e-5, rtol=1e-5)

    # Ragged multi-tile path: grid = cdiv(B, TB) with a masked partial block.
    B2 = 1000
    hG2 = jax.random.normal(jax.random.PRNGKey(7), (B2, graph_dim), jnp.float32)
    hv2 = jax.random.normal(jax.random.PRNGKey(8), (B2, node_embedding_dim),
                            jnp.float32)
    out2 = jax.block_until_ready(
        f_add_edge_forward_batched(hG2, hv2, weight, bias))
    x2 = jnp.concatenate([hG2, hv2], axis=1)
    ref2 = jax.nn.softmax(x2 @ weight.T + bias, axis=-1)
    assert out2.shape == (2, B2)
    assert jnp.allclose(out2, ref2.T, atol=1e-5, rtol=1e-5)

    # Single-edge call matching the original module's forward().
    out1 = jax.block_until_ready(f_add_edge_forward(h_G, h_v, weight, bias))
    x1 = jnp.concatenate([h_G, h_v], axis=0)
    ref1 = jax.nn.softmax(weight @ x1 + bias, axis=0)
    assert out1.shape == (2,)
    assert jnp.allclose(out1, ref1, atol=1e-5, rtol=1e-5)

    print("KERNEL_OK")
</pallas_src>

<mosaic_0001>
module attributes {stable_mosaic.version = 11 : i64} {
  func.func @_fae_kernel(%arg0: i32, %arg1: memref<200x32xf32, #tpu.memory_space<vmem>>, %arg2: memref<200x32xf32, #tpu.memory_space<vmem>>, %arg3: memref<1x32xf32, #tpu.memory_space<vmem>>, %arg4: memref<1x32xf32, #tpu.memory_space<vmem>>, %arg5: memref<1x1xf32, #tpu.memory_space<vmem>>, %arg6: memref<2x200xf32, #tpu.memory_space<vmem>>) attributes {dimension_semantics = [#tpu.dimension_semantics<parallel>], iteration_bounds = array<i64: 1>, scalar_prefetch = 0 : i64, scratch_operands = 0 : i64, tpu.core_type = #tpu.core_type<tc>, window_params = [{transform_indices = @transform_0, window_bounds = array<i64: 200, 32>}, {transform_indices = @transform_1, window_bounds = array<i64: 200, 32>}, {pipeline_mode = #tpu.pipeline_mode<synchronous>, transform_indices = @transform_2, window_bounds = array<i64: 1, 32>}, {pipeline_mode = #tpu.pipeline_mode<synchronous>, transform_indices = @transform_3, window_bounds = array<i64: 1, 32>}, {pipeline_mode = #tpu.pipeline_mode<synchronous>, transform_indices = @transform_4, window_bounds = array<i64: 1, 1>}, {transform_indices = @transform_5, window_bounds = array<i64: 2, 200>}]} {
    %c0 = arith.constant 0 : index
    %c0_0 = arith.constant 0 : index
    %0 = vector.load %arg3[%c0, %c0_0] : memref<1x32xf32, #tpu.memory_space<vmem>>, vector<1x32xf32>
    %c0_1 = arith.constant 0 : index
    %c0_2 = arith.constant 0 : index
    %1 = vector.load %arg1[%c0_1, %c0_2] : memref<200x32xf32, #tpu.memory_space<vmem>>, vector<200x32xf32>
    %cst = arith.constant dense<0.000000e+00> : vector<1x200xf32>
    %2 = tpu.matmul %0, %1, %cst {dimension_numbers = #tpu.dot_dimension_numbers<[1], [1], [0], [0], [0, 0, 1, 0], [], []>} : vector<1x32xf32>, vector<200x32xf32>, vector<1x200xf32> -> vector<1x200xf32>
    %c0_3 = arith.constant 0 : index
    %c0_4 = arith.constant 0 : index
    %3 = vector.load %arg4[%c0_3, %c0_4] : memref<1x32xf32, #tpu.memory_space<vmem>>, vector<1x32xf32>
    %c0_5 = arith.constant 0 : index
    %c0_6 = arith.constant 0 : index
    %4 = vector.load %arg2[%c0_5, %c0_6] : memref<200x32xf32, #tpu.memory_space<vmem>>, vector<200x32xf32>
    %cst_7 = arith.constant dense<0.000000e+00> : vector<1x200xf32>
    %5 = tpu.matmul %3, %4, %cst_7 {dimension_numbers = #tpu.dot_dimension_numbers<[1], [1], [0], [0], [0, 0, 1, 0], [], []>} : vector<1x32xf32>, vector<200x32xf32>, vector<1x200xf32> -> vector<1x200xf32>
    %6 = arith.addf %2, %5 : vector<1x200xf32>
    %c0_8 = arith.constant 0 : index
    %c0_9 = arith.constant 0 : index
    %7 = vector.load %arg5[%c0_8, %c0_9] : memref<1x1xf32, #tpu.memory_space<vmem>>, vector<1x1xf32>
    %8 = vector.broadcast %7 : vector<1x1xf32> to vector<1x200xf32>
    %9 = arith.addf %6, %8 : vector<1x200xf32>
    %10 = math.exp %9 : vector<1x200xf32>
    %cst_10 = arith.constant 1.000000e+00 : f32
    %11 = vector.broadcast %cst_10 : f32 to vector<1x200xf32>
    %12 = arith.addf %11, %10 : vector<1x200xf32>
    %cst_11 = arith.constant 1.000000e+00 : f32
    %13 = vector.broadcast %cst_11 : f32 to vector<1x200xf32>
    %14 = arith.divf %13, %12 : vector<1x200xf32>
    %cst_12 = arith.constant 1.000000e+00 : f32
    %15 = vector.broadcast %cst_12 : f32 to vector<1x200xf32>
    %16 = arith.subf %15, %14 : vector<1x200xf32>
    %17 = tpu.concatenate %14, %16 in 0 : vector<1x200xf32>, vector<1x200xf32> -> vector<2x200xf32>
    %c0_13 = arith.constant 0 : index
    %c0_14 = arith.constant 0 : index
    %18 = vector.load %arg6[%c0_13, %c0_14] : memref<2x200xf32, #tpu.memory_space<vmem>>, vector<2x200xf32>
    tpu.vector_store %arg6[%c0_13, %c0_14], %17 {strides = array<i32>} : memref<2x200xf32, #tpu.memory_space<vmem>>, vector<2x200xf32>,
    return
  }
  func.func @transform_0(%arg0: i32) -> (i32, i32) {
    %c0_i32 = arith.constant 0 : i32
    %c0_i32_0 = arith.constant 0 : i32
    return %arg0, %c0_i32 : i32, i32
  }
  func.func @transform_1(%arg0: i32) -> (i32, i32) {
    %c0_i32 = arith.constant 0 : i32
    %c0_i32_0 = arith.constant 0 : i32
    return %arg0, %c0_i32 : i32, i32
  }
  func.func @transform_2(%arg0: i32) -> (i32, i32) {
    %c0_i32 = arith.constant 0 : i32
    %c0_i32_0 = arith.constant 0 : i32
    %c0_i32_1 = arith.constant 0 : i32
    return %c0_i32, %c0_i32_0 : i32, i32
  }
  func.func @transform_3(%arg0: i32) -> (i32, i32) {
    %c0_i32 = arith.constant 0 : i32
    %c0_i32_0 = arith.constant 0 : i32
    %c0_i32_1 = arith.constant 0 : i32
    return %c0_i32, %c0_i32_0 : i32, i32
  }
  func.func @transform_4(%arg0: i32) -> (i32, i32) {
    %c0_i32 = arith.constant 0 : i32
    %c0_i32_0 = arith.constant 0 : i32
    %c0_i32_1 = arith.constant 0 : i32
    return %c0_i32, %c0_i32_0 : i32, i32
  }
  func.func @transform_5(%arg0: i32) -> (i32, i32) {
    %c0_i32 = arith.constant 0 : i32
    %c0_i32_0 = arith.constant 0 : i32
    return %c0_i32, %arg0 : i32, i32
  }
}

</mosaic_0001>

<llo_original>
// kernel: f_add_edge_forward_batched.1
$region0: #{f_add_edge_forward_batched.1}
  #allocation0 [shape = 'u32[]', space=smem, size = 0x4, offset = 0x4, fixed_abs, tag = 'smem constant byte address 0x4 - core index']
  #allocation1 [shape = 'u32[144,128]{1,0:T(1,128)}', space=vmem, size = 0x12000, scoped, tag = 'internal scratch']
  #allocation2 [shape = 'f32[1,1]{1,0:T(1,128)S(1)}', space=vmem, size = 0x200, scoped, tag = 'scoped memory for f_add_edge_forward_batched.1']
  %s0 = inlined_call_operand.vmem [shape: f32[200,32], index: 0, kind: input, shape index: {}]
  %s1 = inlined_call_operand.vmem [shape: f32[200,32], index: 1, kind: input, shape index: {}]
  %s2 = inlined_call_operand.vmem [shape: f32[1,32], index: 2, kind: input, shape index: {}]
  %s3 = inlined_call_operand.vmem [shape: f32[1,32], index: 3, kind: input, shape index: {}]
  %s4 = inlined_call_operand.<no memory space> [shape: f32[1,1], index: 4, kind: input, shape index: {}]
  %s5 = inlined_call_operand.hbm [shape: f32[2,200], index: 5, kind: output, shape index: {}]
  %s6 = sld [smem:[#allocation0]]
  $region30: #{f_add_edge_forward_batched.1} parent=0
    _
  %s8 = ssub.s32 1, %s6
  %s9 = scalar_select 0, %s8, %s6
  %v10 = vstv %s4
  %11 = vst [vmem:[#allocation2] sm:$0x1] %v10
  $region1: #{f_add_edge_forward_batched.1} parent=0
    #allocation3 [shape = 'u8[2048]{0}', space=vmem, size = 0x800, scoped, tag = 'output window, operand 0, single buffered']
    #allocation4 [shape = 's32[1]{0}', space=sflag, size = 0x4, scoped, tag = 'scoped memory for f_add_edge_forward_batched.1']
    %12 = vsyncpa [#allocation4], 0
    // Predicated region
    $region2: #{f_add_edge_forward_batched.1} parent=1 // pred_check
      _
    $region3: #{f_add_edge_forward_batched.1} parent=1 // pred_check_branch
      %14 = sbr.rel (0) target = $region5
    $region4: #{f_add_edge_forward_batched.1} parent=1 // pred_region
      _
    $region5: #{f_add_edge_forward_batched.1} parent=1 // pred_fallthru
      _
    // Predicated region
    $region6: #{f_add_edge_forward_batched.1} parent=1 // pred_check
      _
    $region7: #{f_add_edge_forward_batched.1} parent=1 // pred_check_branch
      %16 = sbr.rel (0) target = $region9
    $region8: #{f_add_edge_forward_batched.1} parent=1 // pred_region
      _
    $region9: #{f_add_edge_forward_batched.1} parent=1 // pred_fallthru
      _
    // Predicated region
    $region10: #{f_add_edge_forward_batched.1} parent=1 // pred_check
      _
    $region11: #{f_add_edge_forward_batched.1} parent=1 // pred_check_branch
      %18 = sbr.rel (0) target = $region13
    $region12: #{f_add_edge_forward_batched.1} parent=1 // pred_region
      _
    $region13: #{f_add_edge_forward_batched.1} parent=1 // pred_fallthru
      _
    // Predicated region
    $region14: #{f_add_edge_forward_batched.1} parent=1 // pred_check
      _
    $region15: #{f_add_edge_forward_batched.1} parent=1 // pred_check_branch
      %20 = sbr.rel (0) target = $region17
    $region16: #{f_add_edge_forward_batched.1} parent=1 // pred_region
      _
    $region17: #{f_add_edge_forward_batched.1} parent=1 // pred_fallthru
      _
    // Predicated region
    $region18: #{f_add_edge_forward_batched.1} parent=1 // pred_check
      _
    $region19: #{f_add_edge_forward_batched.1} parent=1 // pred_check_branch
      %22 = sbr.rel (0) target = $region21
    $region20: #{f_add_edge_forward_batched.1} parent=1 // pred_region
      _
    $region21: #{f_add_edge_forward_batched.1} parent=1 // pred_fallthru
      _
    %v23 = vld [vmem:[%s2] sm:$0x1]
    %v24 = vld [vmem:[%s0] sm:$0xff]
    %v25 = vld [vmem:[%s0 + $0x8] sm:$0xff]
    %v26 = vld [vmem:[%s0 + $0x10] sm:$0xff]
    %v27 = vld [vmem:[%s0 + $0x18] sm:$0xff]
    %v28 = vld [vmem:[%s0 + $0x20] sm:$0xff]
    %v29 = vld [vmem:[%s0 + $0x28] sm:$0xff]
    %v30 = vld [vmem:[%s0 + $0x30] sm:$0xff]
    %v31 = vld [vmem:[%s0 + $0x38] sm:$0xff]
    %v32 = vld [vmem:[%s0 + $0x40] sm:$0xff]
    %v33 = vld [vmem:[%s0 + $0x48] sm:$0xff]
    %v34 = vld [vmem:[%s0 + $0x50] sm:$0xff]
    %v35 = vld [vmem:[%s0 + $0x58] sm:$0xff]
    %v36 = vld [vmem:[%s0 + $0x60] sm:$0xff]
    %v37 = vld [vmem:[%s0 + $0x68] sm:$0xff]
    %v38 = vld [vmem:[%s0 + $0x70] sm:$0xff]
    %v39 = vld [vmem:[%s0 + $0x78] sm:$0xff]
    %v40 = vld [vmem:[%s0 + $0x80] sm:$0xff]
    %v41 = vld [vmem:[%s0 + $0x88] sm:$0xff]
    %v42 = vld [vmem:[%s0 + $0x90] sm:$0xff]
    %v43 = vld [vmem:[%s0 + $0x98] sm:$0xff]
    %v44 = vld [vmem:[%s0 + $0xa0] sm:$0xff]
    %v45 = vld [vmem:[%s0 + $0xa8] sm:$0xff]
    %v46 = vld [vmem:[%s0 + $0xb0] sm:$0xff]
    %v47 = vld [vmem:[%s0 + $0xb8] sm:$0xff]
    %v48 = vld [vmem:[%s0 + $0xc0] sm:$0xff]
    %v49 = vld [vmem:[%s3] sm:$0x1]
    %v50 = vld [vmem:[%s1] sm:$0xff]
    %v51 = vld [vmem:[%s1 + $0x8] sm:$0xff]
    %v52 = vld [vmem:[%s1 + $0x10] sm:$0xff]
    %v53 = vld [vmem:[%s1 + $0x18] sm:$0xff]
    %v54 = vld [vmem:[%s1 + $0x20] sm:$0xff]
    %v55 = vld [vmem:[%s1 + $0x28] sm:$0xff]
    %v56 = vld [vmem:[%s1 + $0x30] sm:$0xff]
    %v57 = vld [vmem:[%s1 + $0x38] sm:$0xff]
    %v58 = vld [vmem:[%s1 + $0x40] sm:$0xff]
    %v59 = vld [vmem:[%s1 + $0x48] sm:$0xff]
    %v60 = vld [vmem:[%s1 + $0x50] sm:$0xff]
    %v61 = vld [vmem:[%s1 + $0x58] sm:$0xff]
    %v62 = vld [vmem:[%s1 + $0x60] sm:$0xff]
    %v63 = vld [vmem:[%s1 + $0x68] sm:$0xff]
    %v64 = vld [vmem:[%s1 + $0x70] sm:$0xff]
    %v65 = vld [vmem:[%s1 + $0x78] sm:$0xff]
    %v66 = vld [vmem:[%s1 + $0x80] sm:$0xff]
    %v67 = vld [vmem:[%s1 + $0x88] sm:$0xff]
    %v68 = vld [vmem:[%s1 + $0x90] sm:$0xff]
    %v69 = vld [vmem:[%s1 + $0x98] sm:$0xff]
    %v70 = vld [vmem:[%s1 + $0xa0] sm:$0xff]
    %v71 = vld [vmem:[%s1 + $0xa8] sm:$0xff]
    %v72 = vld [vmem:[%s1 + $0xb0] sm:$0xff]
    %v73 = vld [vmem:[%s1 + $0xb8] sm:$0xff]
    %v74 = vld [vmem:[%s1 + $0xc0] sm:$0xff]
    %vm75 = vcmask 261120
    %v77 = vsel %vm75, %v49, 0
    %v80 = vsel %vm75, %v50, 0
    %v83 = vsel %vm75, %v51, 0
    %v86 = vsel %vm75, %v52, 0
    %v89 = vsel %vm75, %v53, 0
    %v92 = vsel %vm75, %v54, 0
    %v95 = vsel %vm75, %v55, 0
    %v98 = vsel %vm75, %v56, 0
    %v101 = vsel %vm75, %v57, 0
    %v104 = vsel %vm75, %v58, 0
    %v107 = vsel %vm75, %v59, 0
    %v110 = vsel %vm75, %v60, 0
    %v113 = vsel %vm75, %v61, 0
    %v116 = vsel %vm75, %v62, 0
    %v119 = vsel %vm75, %v63, 0
    %v122 = vsel %vm75, %v64, 0
    %v125 = vsel %vm75, %v65, 0
    %v128 = vsel %vm75, %v66, 0
    %v131 = vsel %vm75, %v67, 0
    %v134 = vsel %vm75, %v68, 0
    %v137 = vsel %vm75, %v69, 0
    %v140 = vsel %vm75, %v70, 0
    %v143 = vsel %vm75, %v71, 0
    %v146 = vsel %vm75, %v72, 0
    %v149 = vsel %vm75, %v73, 0
    %v152 = vsel %vm75, %v74, 0
    %154 = vmatprep.subr.mxu0 0.0
    %155 = vmatpush1.xpose.msra.mxu0 %v125
    %156 = vmatprep.subr.mxu0 0.0
    %157 = vmatpush1.xpose.msra.mxu0 %v122
    %158 = vmatprep.subr.mxu0 0.0
    %159 = vmatpush1.xpose.msra.mxu0 %v119
    %160 = vmatprep.subr.mxu0 0.0
    %161 = vmatpush1.xpose.msra.mxu0 %v116
    %162 = vmatprep.subr.mxu0 0.0
    %163 = vmatpush1.xpose.msra.mxu0 %v113
    %164 = vmatprep.subr.mxu0 0.0
    %165 = vmatpush1.xpose.msra.mxu0 %v110
    %166 = vmatprep.subr.mxu0 0.0
    %167 = vmatpush1.xpose.msra.mxu0 %v107
    %168 = vmatprep.subr.mxu0 0.0
    %169 = vmatpush1.xpose.msra.mxu0 %v104
    %170 = vmatprep.subr.mxu0 0.0
    %171 = vmatpush1.xpose.msra.mxu0 %v101
    %172 = vmatprep.subr.mxu0 0.0
    %173 = vmatpush1.xpose.msra.mxu0 %v98
    %174 = vmatprep.subr.mxu0 0.0
    %175 = vmatpush1.xpose.msra.mxu0 %v95
    %176 = vmatprep.subr.mxu0 0.0
    %177 = vmatpush1.xpose.msra.mxu0 %v92
    %178 = vmatprep.subr.mxu0 0.0
    %179 = vmatpush1.xpose.msra.mxu0 %v89
    %180 = vmatprep.subr.mxu0 0.0
    %181 = vmatpush1.xpose.msra.mxu0 %v86
    %182 = vmatprep.subr.mxu0 0.0
    %183 = vmatpush1.xpose.msra.mxu0 %v83
    %184 = vmatprep.subr.mxu0 0.0
    %185 = vmatpush1.xpose.msra.mxu0 %v80
    %186 = vmatprep.subr.mxu0 0.0
    %187 = vmatpush2.xpose.msra.mxu0 0.0
    %188 = vmatprep.subr.mxu0 0.0
    %189 = vmatpush2.xpose.msra.mxu0 0.0
    %190 = vmatprep.subr.mxu0 0.0
    %191 = vmatpush2.xpose.msra.mxu0 0.0
    %192 = vmatprep.subr.mxu0 0.0
    %193 = vmatpush2.xpose.msra.mxu0 0.0
    %194 = vmatprep.subr.mxu0 0.0
    %195 = vmatpush2.xpose.msra.mxu0 0.0
    %196 = vmatprep.subr.mxu0 0.0
    %197 = vmatpush2.xpose.msra.mxu0 0.0
    %198 = vmatprep.subr.mxu0 0.0
    %199 = vmatpush2.xpose.msra.mxu0 0.0
    %200 = vmatprep.subr.mxu0 0.0
    %201 = vmatpush2.xpose.msra.mxu0 %v152
    %202 = vmatprep.subr.mxu0 0.0
    %203 = vmatpush2.xpose.msra.mxu0 %v149
    %204 = vmatprep.subr.mxu0 0.0
    %205 = vmatpush2.xpose.msra.mxu0 %v146
    %206 = vmatprep.subr.mxu0 0.0
    %207 = vmatpush2.xpose.msra.mxu0 %v143
    %208 = vmatprep.subr.mxu0 0.0
    %209 = vmatpush2.xpose.msra.mxu0 %v140
    %210 = vmatprep.subr.mxu0 0.0
    %211 = vmatpush2.xpose.msra.mxu0 %v137
    %212 = vmatprep.subr.mxu0 0.0
    %213 = vmatpush2.xpose.msra.mxu0 %v134
    %214 = vmatprep.subr.mxu0 0.0
    %215 = vmatpush2.xpose.msra.mxu0 %v131
    %216 = vmatprep.subr.mxu0 0.0
    %217 = vmatpush2.xpose.msra.mxu0 %v128
    %218 = vmatprep.mubr.f32.mxu0 0.0
    %219 = vmatmul.mubr.f32.gmra.mxu0 %v77
    %v220 = vpop.f32.mrf.mxu0
    %v221 = vadd.f32 0.0, %v220
    %v222 = vpop.f32.mrf.mxu0
    %v223 = vadd.f32 0.0, %v222
    %224 = vdwg.mxu0
    %v226 = vsel %vm75, %v23, 0
    %v229 = vsel %vm75, %v24, 0
    %v232 = vsel %vm75, %v25, 0
    %v235 = vsel %vm75, %v26, 0
    %v238 = vsel %vm75, %v27, 0
    %v241 = vsel %vm75, %v28, 0
    %v244 = vsel %vm75, %v29, 0
    %v247 = vsel %vm75, %v30, 0
    %v250 = vsel %vm75, %v31, 0
    %v253 = vsel %vm75, %v32, 0
    %v256 = vsel %vm75, %v33, 0
    %v259 = vsel %vm75, %v34, 0
    %v262 = vsel %vm75, %v35, 0
    %v265 = vsel %vm75, %v36, 0
    %v268 = vsel %vm75, %v37, 0
    %v271 = vsel %vm75, %v38, 0
    %v274 = vsel %vm75, %v39, 0
    %v277 = vsel %vm75, %v40, 0
    %v280 = vsel %vm75, %v41, 0
    %v283 = vsel %vm75, %v42, 0
    %v286 = vsel %vm75, %v43, 0
    %v289 = vsel %vm75, %v44, 0
    %v292 = vsel %vm75, %v45, 0
    %v295 = vsel %vm75, %v46, 0
    %v298 = vsel %vm75, %v47, 0
    %v301 = vsel %vm75, %v48, 0
    %303 = vmatprep.subr.mxu0 0.0
    %304 = vmatpush1.xpose.msra.mxu0 %v274
    %305 = vmatprep.subr.mxu0 0.0
    %306 = vmatpush1.xpose.msra.mxu0 %v271
    %307 = vmatprep.subr.mxu0 0.0
    %308 = vmatpush1.xpose.msra.mxu0 %v268
    %309 = vmatprep.subr.mxu0 0.0
    %310 = vmatpush1.xpose.msra.mxu0 %v265
    %311 = vmatprep.subr.mxu0 0.0
    %312 = vmatpush1.xpose.msra.mxu0 %v262
    %313 = vmatprep.subr.mxu0 0.0
    %314 = vmatpush1.xpose.msra.mxu0 %v259
    %315 = vmatprep.subr.mxu0 0.0
    %316 = vmatpush1.xpose.msra.mxu0 %v256
    %317 = vmatprep.subr.mxu0 0.0
    %318 = vmatpush1.xpose.msra.mxu0 %v253
    %319 = vmatprep.subr.mxu0 0.0
    %320 = vmatpush1.xpose.msra.mxu0 %v250
    %321 = vmatprep.subr.mxu0 0.0
    %322 = vmatpush1.xpose.msra.mxu0 %v247
    %323 = vmatprep.subr.mxu0 0.0
    %324 = vmatpush1.xpose.msra.mxu0 %v244
    %325 = vmatprep.subr.mxu0 0.0
    %326 = vmatpush1.xpose.msra.mxu0 %v241
    %327 = vmatprep.subr.mxu0 0.0
    %328 = vmatpush1.xpose.msra.mxu0 %v238
    %329 = vmatprep.subr.mxu0 0.0
    %330 = vmatpush1.xpose.msra.mxu0 %v235
    %331 = vmatprep.subr.mxu0 0.0
    %332 = vmatpush1.xpose.msra.mxu0 %v232
    %333 = vmatprep.subr.mxu0 0.0
    %334 = vmatpush1.xpose.msra.mxu0 %v229
    %335 = vmatprep.subr.mxu0 0.0
    %336 = vmatpush2.xpose.msra.mxu0 0.0
    %337 = vmatprep.subr.mxu0 0.0
    %338 = vmatpush2.xpose.msra.mxu0 0.0
    %339 = vmatprep.subr.mxu0 0.0
    %340 = vmatpush2.xpose.msra.mxu0 0.0
    %341 = vmatprep.subr.mxu0 0.0
    %342 = vmatpush2.xpose.msra.mxu0 0.0
    %343 = vmatprep.subr.mxu0 0.0
    %344 = vmatpush2.xpose.msra.mxu0 0.0
    %345 = vmatprep.subr.mxu0 0.0
    %346 = vmatpush2.xpose.msra.mxu0 0.0
    %347 = vmatprep.subr.mxu0 0.0
    %348 = vmatpush2.xpose.msra.mxu0 0.0
    %349 = vmatprep.subr.mxu0 0.0
    %350 = vmatpush2.xpose.msra.mxu0 %v301
    %351 = vmatprep.subr.mxu0 0.0
    %352 = vmatpush2.xpose.msra.mxu0 %v298
    %353 = vmatprep.subr.mxu0 0.0
    %354 = vmatpush2.xpose.msra.mxu0 %v295
    %355 = vmatprep.subr.mxu0 0.0
    %356 = vmatpush2.xpose.msra.mxu0 %v292
    %357 = vmatprep.subr.mxu0 0.0
    %358 = vmatpush2.xpose.msra.mxu0 %v289
    %359 = vmatprep.subr.mxu0 0.0
    %360 = vmatpush2.xpose.msra.mxu0 %v286
    %361 = vmatprep.subr.mxu0 0.0
    %362 = vmatpush2.xpose.msra.mxu0 %v283
    %363 = vmatprep.subr.mxu0 0.0
    %364 = vmatpush2.xpose.msra.mxu0 %v280
    %365 = vmatprep.subr.mxu0 0.0
    %366 = vmatpush2.xpose.msra.mxu0 %v277
    %367 = vmatprep.mubr.f32.mxu0 0.0
    %368 = vmatmul.mubr.f32.gmra.mxu0 %v226
    %v369 = vpop.f32.mrf.mxu0
    %v370 = vadd.f32 %v221, %v369
    %v371 = vpop.f32.mrf.mxu0
    %v372 = vadd.f32 %v223, %v371
    %373 = vdwg.mxu0
    %v374 = vld [vmem:[#allocation2] sm:$0x1]
    %376 = vset.pattern.permute.xlu0 0
    %377 = vperm.xlu0 %376, %v374
    %v378 = vpop.permute.xlu0 %377
    %v380 = vlaneseq
    %v381 = vshrl.u32 %v380, 7
    %v382 = vsub.s32 0, %v381
    %v383 = vrot.slane %v378, %v382
    %v384 = vadd.f32 %v370, %v383
    %v385 = vadd.f32 %v372, %v383
    %v386 = vmul.f32 %v384, 1.442695
    %v387 = vpow.pop %v386
    %v388 = vmul.f32 %v385, 1.442695
    %v389 = vpow.pop %v388
    %v390 = vadd.f32 %v387, 1.0
    %v391 = vadd.f32 %v389, 1.0
    %v392 = vrcp.pop %v390
    %v393 = vmul.f32 1.0, %v392
    %v394 = vrcp.pop %v391
    %v395 = vmul.f32 1.0, %v394
    %v396 = vsub.f32 1.0, %v393
    %v397 = vsub.f32 1.0, %v395
    %v400 = vrot.slane %v396, 7
    %v401 = vrot.slane %v397, 7
    %vm404 = vcmask 1040384
    %v405 = vsel %vm404, %v393, %v400
    %v406 = vsel %vm404, %v395, %v401
    %v409 = vcombine.low %v405, %v406
    %v411 = vunpack.c.l.s4 1983009808
    %v412 = vunpack.c.0.s8 %v411
    %v413 = vlaneseq
    %v414 = vshrl.u32 %v413, 7
    %v415 = vsub.s32 %v412, %v414
    %v416 = vrot.slane %v409, %v415
    %vm418 = vcmask 1041408
    %vm419 = vcmask 584706
    %vm420 = vmor %vm419, %vm418
    %421 = vst.msk [vmem:[#allocation3] sm:$0xf] %vm420, %v416
    // Predicated region
    $region22: #{f_add_edge_forward_batched.1} parent=1 // pred_check
      _
    $region23: #{f_add_edge_forward_batched.1} parent=1 // pred_check_branch
      %423 = sbr.rel (0) target = $region25
    $region24: #{f_add_edge_forward_batched.1} parent=1 // pred_region
      %s425 = ssub.s32 64, 64
      %426 = vsyncadd [#allocation4], %s425
      %s428 = sshll.u32 [#allocation3], 4
      %s429 = int_to_ptr.vmem [resolvable:$true] %s428
      %431 = dma.vmem_to_hbm [thread:$0]  %s429, 64, %s5, [#allocation4]
    $region25: #{f_add_edge_forward_batched.1} parent=1 // pred_fallthru
      _
    // Predicated region
    $region26: #{f_add_edge_forward_batched.1} parent=1 // pred_check
      _
    $region27: #{f_add_edge_forward_batched.1} parent=1 // pred_check_branch
      %433 = sbr.rel (0) target = $region29
    $region28: #{f_add_edge_forward_batched.1} parent=1 // pred_region
      %434 = dma.done [#allocation4], 64
    $region29: #{f_add_edge_forward_batched.1} parent=1 // pred_fallthru
      _
    %435 = vsyncpa [#allocation4], 1

</llo_original>
